<compile_context>
chip_gen: v5e
topology: v5e:2x2
jax: 0.10.0
libtpu: 0.0.40
codegen_flags: <defaults>
</compile_context>

<pallas_src>
import functools
import math

import jax
import jax.numpy as jnp
from jax.experimental import pallas as pl
from jax.experimental.pallas import tpu as pltpu

LANE = 128             # TPU lane width
SUBLANE = 8            # sublane granularity for second-to-last dims
DEFAULT_TILE_M = 2048  # packed batch rows per grid step (VMEM-safe on v7x)


def _mlp_kernel(x_ref, w0_ref, wmid_ref, wlast_ref, b_ref, blast_ref, o_ref,
                *, num_layers):
    """One batch tile of the whole packed MLP chain.

    x_ref    : (TILE_M, PACK*in_dim)       dense packed input points
    w0_ref   : (PACK*in_dim, LANE)         layer-0 weight (packs + scatters)
    wmid_ref : (max(L-2,1), LANE, LANE)    block-diagonal hidden weights
    wlast_ref: (LANE, PACK*OSEG)           last-layer weight, compact output
    b_ref    : (L-1, 1, LANE)              segment-packed biases, layers 0..L-2
    blast_ref: (1, PACK*OSEG)              compact-packed last-layer bias
    o_ref    : (TILE_M, PACK*OSEG)         compact-packed outputs
    """
    h = jnp.dot(x_ref[...], w0_ref[...],
                preferred_element_type=jnp.float32) + b_ref[0]
    h = jnp.tanh(h)
    for i in range(1, num_layers - 1):       # static unroll; num_layers small
        h = jnp.dot(h, wmid_ref[i - 1],
                    preferred_element_type=jnp.float32) + b_ref[i]
        h = jnp.tanh(h)
    o_ref[...] = (jnp.dot(h, wlast_ref[...],
                          preferred_element_type=jnp.float32)
                  + blast_ref[...]).astype(o_ref.dtype)


def init_pinn_params(key, layer_mat):
    """Matches PINN_Net.Initial_param: xavier_normal_ weights, zero biases.
    lam1/lam2 are randn parameters but unused in forward."""
    num_layers = len(layer_mat) - 1
    keys = jax.random.split(key, num_layers + 2)
    weights, biases = [], []
    for i in range(num_layers):
        fan_in, fan_out = layer_mat[i], layer_mat[i + 1]
        std = math.sqrt(2.0 / (fan_in + fan_out))        # xavier_normal_, gain=1
        w = std * jax.random.normal(keys[i], (fan_in, fan_out), dtype=jnp.float32)
        weights.append(w)
        biases.append(jnp.zeros((fan_out,), dtype=jnp.float32))
    lam1 = jax.random.normal(keys[num_layers], (1,), dtype=jnp.float32)
    lam2 = jax.random.normal(keys[num_layers + 1], (1,), dtype=jnp.float32)
    return weights, biases, lam1, lam2


def _next_pow2(v):
    p = 1
    while p < v:
        p *= 2
    return p


def _choose_packing(layer_mat):
    """seg  = smallest power-of-two lane segment holding every hidden width,
       pack = how many batch points share one 128-lane row,
       oseg = per-point output segment width (power of two)."""
    width = max(layer_mat[1:])
    assert width <= LANE, "layer widths > 128 not supported by this packing"
    seg = _next_pow2(width)
    pack = LANE // seg
    oseg = _next_pow2(layer_mat[-1])
    return seg, pack, oseg


def _pack_params(weights, biases, seg, pack, oseg):
    """Block-diagonal replication of hidden layers into (LANE, LANE) slabs;
    layer 0 re-packed against the dense input, last layer re-packed into a
    compact (LANE, pack*oseg) output slab."""
    in_dim = weights[0].shape[0]
    num_layers = len(weights)

    # Layer 0: rows index the dense packed input, cols the 128-lane hidden row.
    w0 = weights[0]
    fo0 = w0.shape[1]
    w0p = jnp.zeros((pack * in_dim, LANE), jnp.float32)
    for j in range(pack):
        w0p = w0p.at[j * in_dim:(j + 1) * in_dim,
                     j * seg:j * seg + fo0].set(w0)

    # Hidden-to-hidden layers 1..L-2 (block-diagonal).
    w_blocks = []
    for w in weights[1:-1]:
        fi, fo = w.shape
        wp = jnp.zeros((LANE, LANE), jnp.float32)
        for j in range(pack):
            wp = wp.at[j * seg:j * seg + fi, j * seg:j * seg + fo].set(w)
        w_blocks.append(wp)
    if w_blocks:
        wmid = jnp.stack(w_blocks, axis=0)
    else:  # num_layers == 2: no middle layers; dummy slab (never read).
        wmid = jnp.zeros((1, LANE, LANE), jnp.float32)

    # Last layer: compact each point's outputs into a contiguous oseg-lane slot.
    wl = weights[-1]
    fil, out_dim = wl.shape
    out_cols = pack * oseg
    wlp = jnp.zeros((LANE, out_cols), jnp.float32)
    for j in range(pack):
        wlp = wlp.at[j * seg:j * seg + fil,
                     j * oseg:j * oseg + out_dim].set(wl)

    # Biases for layers 0..L-2 (full 128-lane rows).
    b_rows = []
    for b in biases[:-1]:
        fo = b.shape[0]
        bp = jnp.zeros((1, LANE), jnp.float32)
        for j in range(pack):
            bp = bp.at[0, j * seg:j * seg + fo].set(b)
        b_rows.append(bp)
    b_hid = jnp.stack(b_rows, axis=0)

    # Last bias, compact-packed.
    bl = biases[-1]
    blp = jnp.zeros((1, out_cols), jnp.float32)
    for j in range(pack):
        blp = blp.at[0, j * oseg:j * oseg + out_dim].set(bl)

    return w0p, wmid, wlp, b_hid, blp


def pinn_forward(x, y, weights, biases, *, tile_m=DEFAULT_TILE_M):
    """Equivalent of PINN_Net.forward: predict = base(cat([x, y], dim=1))."""
    num_layers = len(weights)
    assert num_layers >= 2, "need at least one hidden layer"
    in_dim = weights[0].shape[0]
    out_dim = weights[-1].shape[1]
    layer_mat = [in_dim] + [w.shape[1] for w in weights]
    seg, pack, oseg = _choose_packing(layer_mat)
    out_cols = pack * oseg

    X = jnp.concatenate([x, y], axis=1).astype(jnp.float32)      # (N, in_dim)
    n = X.shape[0]

    # Pack `pack` points per 128-lane row; tile the packed rows over the grid.
    rows = -(-n // pack)
    tile_m = max(SUBLANE, (tile_m // SUBLANE) * SUBLANE)
    tile = min(tile_m, -(-rows // SUBLANE) * SUBLANE)
    rows_pad = -(-rows // tile) * tile
    grid = (rows_pad // tile,)

    # Dense packed input: exactly in_dim floats per point (no 128-lane pad).
    Xp = jnp.zeros((rows_pad * pack, in_dim), jnp.float32).at[:n, :].set(X)
    Xp = Xp.reshape(rows_pad, pack * in_dim)
    k0 = pack * in_dim

    w0p, wmid, wlp, b_hid, blp = _pack_params(weights, biases, seg, pack, oseg)
    num_mid = wmid.shape[0]

    kernel = functools.partial(_mlp_kernel, num_layers=num_layers)
    out_packed = pl.pallas_call(
        kernel,
        out_shape=jax.ShapeDtypeStruct((rows_pad, out_cols), jnp.float32),
        grid=grid,
        in_specs=[
            # batch-streamed input tiles
            pl.BlockSpec((tile, k0), lambda i: (i, 0)),
            # weights / biases: constant index_map -> fetched once, resident
            pl.BlockSpec((k0, LANE), lambda i: (0, 0)),
            pl.BlockSpec((num_mid, LANE, LANE), lambda i: (0, 0, 0)),
            pl.BlockSpec((LANE, out_cols), lambda i: (0, 0)),
            pl.BlockSpec((num_layers - 1, 1, LANE), lambda i: (0, 0, 0)),
            pl.BlockSpec((1, out_cols), lambda i: (0, 0)),
        ],
        out_specs=pl.BlockSpec((tile, out_cols), lambda i: (i, 0)),
        compiler_params=pltpu.CompilerParams(
            dimension_semantics=("parallel",)),    # megacore split on v7x
    )(Xp, w0p, wmid, wlp, b_hid, blp)

    # Unpack: row r, slot j -> point pack*r + j (contiguous oseg lanes each).
    out = out_packed.reshape(rows_pad * pack, oseg)[:n, :out_dim]
    return out


def pinn_forward_ref(x, y, weights, biases):
    """Plain-JAX reference for correctness checking."""
    h = jnp.concatenate([x, y], axis=1).astype(jnp.float32)
    num_layers = len(weights)
    for i in range(num_layers):
        h = h @ weights[i] + biases[i]
        if i < num_layers - 1:
            h = jnp.tanh(h)
    return h


if __name__ == "__main__":
    # layer_mat = [2, 32, 32, 32, 3]: (x, y) -> 3 hidden tanh layers -> (u, v, p)
    layer_mat = [2, 32, 32, 32, 3]
    key = jax.random.PRNGKey(0)
    kp, kx, ky = jax.random.split(key, 3)
    weights, biases, lam1, lam2 = init_pinn_params(kp, layer_mat)
    # TODO(synk): lam1/lam2 and requires_grad_ are training-time bookkeeping,
    # not part of the forward compute, so they are carried but unused here.

    # Small single-tile check.
    N = 64
    x = jax.random.normal(kx, (N, 1), dtype=jnp.float32)
    y = jax.random.normal(ky, (N, 1), dtype=jnp.float32)
    out = jax.block_until_ready(pinn_forward(x, y, weights, biases))
    ref = pinn_forward_ref(x, y, weights, biases)
    assert out.shape == (N, layer_mat[-1])
    assert jnp.allclose(out, ref, atol=1e-4, rtol=1e-4), "mismatch vs reference (1)"

    # Multi-tile check: exercises the batch grid and a partial last tile.
    N2 = 1037
    kx2, ky2 = jax.random.split(jax.random.PRNGKey(1))
    x2 = jax.random.normal(kx2, (N2, 1), dtype=jnp.float32)
    y2 = jax.random.normal(ky2, (N2, 1), dtype=jnp.float32)
    out2 = jax.block_until_ready(pinn_forward(x2, y2, weights, biases, tile_m=64))
    ref2 = pinn_forward_ref(x2, y2, weights, biases)
    assert out2.shape == (N2, layer_mat[-1])
    assert jnp.allclose(out2, ref2, atol=1e-4, rtol=1e-4), "mismatch vs reference (2)"

    print("KERNEL_OK")
</pallas_src>

<mosaic_0001>
module attributes {stable_mosaic.version = 11 : i64} {
  func.func @_mlp_kernel(%arg0: i32, %arg1: memref<16x8xf32, #tpu.memory_space<vmem>>, %arg2: memref<8x128xf32, #tpu.memory_space<vmem>>, %arg3: memref<2x128x128xf32, #tpu.memory_space<vmem>>, %arg4: memref<128x16xf32, #tpu.memory_space<vmem>>, %arg5: memref<3x1x128xf32, #tpu.memory_space<vmem>>, %arg6: memref<1x16xf32, #tpu.memory_space<vmem>>, %arg7: memref<16x16xf32, #tpu.memory_space<vmem>>) attributes {dimension_semantics = [#tpu.dimension_semantics<parallel>], iteration_bounds = array<i64: 1>, scalar_prefetch = 0 : i64, scratch_operands = 0 : i64, tpu.core_type = #tpu.core_type<tc>, window_params = [{transform_indices = @transform_0, window_bounds = array<i64: 16, 8>}, {pipeline_mode = #tpu.pipeline_mode<synchronous>, transform_indices = @transform_1, window_bounds = array<i64: 8, 128>}, {pipeline_mode = #tpu.pipeline_mode<synchronous>, transform_indices = @transform_2, window_bounds = array<i64: 2, 128, 128>}, {pipeline_mode = #tpu.pipeline_mode<synchronous>, transform_indices = @transform_3, window_bounds = array<i64: 128, 16>}, {pipeline_mode = #tpu.pipeline_mode<synchronous>, transform_indices = @transform_4, window_bounds = array<i64: 3, 1, 128>}, {pipeline_mode = #tpu.pipeline_mode<synchronous>, transform_indices = @transform_5, window_bounds = array<i64: 1, 16>}, {transform_indices = @transform_6, window_bounds = array<i64: 16, 16>}]} {
    %c0 = arith.constant 0 : index
    %c0_0 = arith.constant 0 : index
    %0 = vector.load %arg1[%c0, %c0_0] : memref<16x8xf32, #tpu.memory_space<vmem>>, vector<16x8xf32>
    %c0_1 = arith.constant 0 : index
    %c0_2 = arith.constant 0 : index
    %1 = vector.load %arg2[%c0_1, %c0_2] : memref<8x128xf32, #tpu.memory_space<vmem>>, vector<8x128xf32>
    %cst = arith.constant dense<0.000000e+00> : vector<16x128xf32>
    %2 = tpu.matmul %0, %1, %cst {dimension_numbers = #tpu.dot_dimension_numbers<[1], [0], [0], [1], [0, 0, 1, 1], [], []>} : vector<16x8xf32>, vector<8x128xf32>, vector<16x128xf32> -> vector<16x128xf32>
    %c0_3 = arith.constant 0 : index
    %c0_4 = arith.constant 0 : index
    %c0_5 = arith.constant 0 : index
    %3 = vector.load %arg5[%c0_3, %c0_4, %c0_5] : memref<3x1x128xf32, #tpu.memory_space<vmem>>, vector<1x1x128xf32>
    %4 = vector.shape_cast %3 : vector<1x1x128xf32> to vector<1x128xf32>
    %5 = vector.broadcast %4 : vector<1x128xf32> to vector<16x128xf32>
    %6 = arith.addf %2, %5 : vector<16x128xf32>
    %7 = math.tanh %6 : vector<16x128xf32>
    %c0_6 = arith.constant 0 : index
    %c0_7 = arith.constant 0 : index
    %c0_8 = arith.constant 0 : index
    %8 = vector.load %arg3[%c0_6, %c0_7, %c0_8] : memref<2x128x128xf32, #tpu.memory_space<vmem>>, vector<1x128x128xf32>
    %9 = vector.shape_cast %8 : vector<1x128x128xf32> to vector<128x128xf32>
    %cst_9 = arith.constant dense<0.000000e+00> : vector<16x128xf32>
    %10 = tpu.matmul %7, %9, %cst_9 {dimension_numbers = #tpu.dot_dimension_numbers<[1], [0], [0], [1], [0, 0, 1, 1], [], []>} : vector<16x128xf32>, vector<128x128xf32>, vector<16x128xf32> -> vector<16x128xf32>
    %c1 = arith.constant 1 : index
    %c0_10 = arith.constant 0 : index
    %c0_11 = arith.constant 0 : index
    %11 = vector.load %arg5[%c1, %c0_10, %c0_11] : memref<3x1x128xf32, #tpu.memory_space<vmem>>, vector<1x1x128xf32>
    %12 = vector.shape_cast %11 : vector<1x1x128xf32> to vector<1x128xf32>
    %13 = vector.broadcast %12 : vector<1x128xf32> to vector<16x128xf32>
    %14 = arith.addf %10, %13 : vector<16x128xf32>
    %15 = math.tanh %14 : vector<16x128xf32>
    %c1_12 = arith.constant 1 : index
    %c0_13 = arith.constant 0 : index
    %c0_14 = arith.constant 0 : index
    %16 = vector.load %arg3[%c1_12, %c0_13, %c0_14] : memref<2x128x128xf32, #tpu.memory_space<vmem>>, vector<1x128x128xf32>
    %17 = vector.shape_cast %16 : vector<1x128x128xf32> to vector<128x128xf32>
    %cst_15 = arith.constant dense<0.000000e+00> : vector<16x128xf32>
    %18 = tpu.matmul %15, %17, %cst_15 {dimension_numbers = #tpu.dot_dimension_numbers<[1], [0], [0], [1], [0, 0, 1, 1], [], []>} : vector<16x128xf32>, vector<128x128xf32>, vector<16x128xf32> -> vector<16x128xf32>
    %c2 = arith.constant 2 : index
    %c0_16 = arith.constant 0 : index
    %c0_17 = arith.constant 0 : index
    %19 = vector.load %arg5[%c2, %c0_16, %c0_17] : memref<3x1x128xf32, #tpu.memory_space<vmem>>, vector<1x1x128xf32>
    %20 = vector.shape_cast %19 : vector<1x1x128xf32> to vector<1x128xf32>
    %21 = vector.broadcast %20 : vector<1x128xf32> to vector<16x128xf32>
    %22 = arith.addf %18, %21 : vector<16x128xf32>
    %23 = math.tanh %22 : vector<16x128xf32>
    %c0_18 = arith.constant 0 : index
    %c0_19 = arith.constant 0 : index
    %24 = vector.load %arg4[%c0_18, %c0_19] : memref<128x16xf32, #tpu.memory_space<vmem>>, vector<128x16xf32>
    %cst_20 = arith.constant dense<0.000000e+00> : vector<16x16xf32>
    %25 = tpu.matmul %23, %24, %cst_20 {dimension_numbers = #tpu.dot_dimension_numbers<[1], [0], [0], [1], [0, 0, 1, 1], [], []>} : vector<16x128xf32>, vector<128x16xf32>, vector<16x16xf32> -> vector<16x16xf32>
    %c0_21 = arith.constant 0 : index
    %c0_22 = arith.constant 0 : index
    %26 = vector.load %arg6[%c0_21, %c0_22] : memref<1x16xf32, #tpu.memory_space<vmem>>, vector<1x16xf32>
    %27 = vector.broadcast %26 : vector<1x16xf32> to vector<16x16xf32>
    %28 = arith.addf %25, %27 : vector<16x16xf32>
    %c0_23 = arith.constant 0 : index
    %c0_24 = arith.constant 0 : index
    %29 = vector.load %arg7[%c0_23, %c0_24] : memref<16x16xf32, #tpu.memory_space<vmem>>, vector<16x16xf32>
    tpu.vector_store %arg7[%c0_23, %c0_24], %28 {strides = array<i32>} : memref<16x16xf32, #tpu.memory_space<vmem>>, vector<16x16xf32>,
    return
  }
  func.func @transform_0(%arg0: i32) -> (i32, i32) {
    %c0_i32 = arith.constant 0 : i32
    %c0_i32_0 = arith.constant 0 : i32
    return %arg0, %c0_i32 : i32, i32
  }
  func.func @transform_1(%arg0: i32) -> (i32, i32) {
    %c0_i32 = arith.constant 0 : i32
    %c0_i32_0 = arith.constant 0 : i32
    %c0_i32_1 = arith.constant 0 : i32
    return %c0_i32, %c0_i32_0 : i32, i32
  }
  func.func @transform_2(%arg0: i32) -> (i32, i32, i32) {
    %c0_i32 = arith.constant 0 : i32
    %c0_i32_0 = arith.constant 0 : i32
    %c0_i32_1 = arith.constant 0 : i32
    %c0_i32_2 = arith.constant 0 : i32
    return %c0_i32, %c0_i32_0, %c0_i32_1 : i32, i32, i32
  }
  func.func @transform_3(%arg0: i32) -> (i32, i32) {
    %c0_i32 = arith.constant 0 : i32
    %c0_i32_0 = arith.constant 0 : i32
    %c0_i32_1 = arith.constant 0 : i32
    return %c0_i32, %c0_i32_0 : i32, i32
  }
  func.func @transform_4(%arg0: i32) -> (i32, i32, i32) {
    %c0_i32 = arith.constant 0 : i32
    %c0_i32_0 = arith.constant 0 : i32
    %c0_i32_1 = arith.constant 0 : i32
    %c0_i32_2 = arith.constant 0 : i32
    return %c0_i32, %c0_i32_0, %c0_i32_1 : i32, i32, i32
  }
  func.func @transform_5(%arg0: i32) -> (i32, i32) {
    %c0_i32 = arith.constant 0 : i32
    %c0_i32_0 = arith.constant 0 : i32
    %c0_i32_1 = arith.constant 0 : i32
    return %c0_i32, %c0_i32_0 : i32, i32
  }
  func.func @transform_6(%arg0: i32) -> (i32, i32) {
    %c0_i32 = arith.constant 0 : i32
    %c0_i32_0 = arith.constant 0 : i32
    return %arg0, %c0_i32 : i32, i32
  }
}

</mosaic_0001>

<llo_original>
// kernel: tpu_custom_call.1
$region0: #{tpu_custom_call.1}
  #allocation0 [shape = 'u32[]', space=smem, size = 0x4, offset = 0x4, fixed_abs, tag = 'smem constant byte address 0x4 - core index']
  #allocation1 [shape = 'u32[72,128]{1,0:T(1,128)}', space=vmem, size = 0x9000, scoped, tag = 'internal scratch']
  %s0 = inlined_call_operand.vmem [shape: f32[16,8], index: 0, kind: input, shape index: {}]
  %s1 = inlined_call_operand.vmem [shape: f32[8,128], index: 1, kind: input, shape index: {}]
  %s2 = inlined_call_operand.hbm [shape: f32[2,128,128], index: 2, kind: input, shape index: {}]
  %s3 = inlined_call_operand.vmem [shape: f32[128,16], index: 3, kind: input, shape index: {}]
  %s4 = inlined_call_operand.vmem [shape: f32[3,1,128], index: 4, kind: input, shape index: {}]
  %s5 = inlined_call_operand.vmem [shape: f32[1,16], index: 5, kind: input, shape index: {}]
  %s6 = inlined_call_operand.hbm [shape: f32[16,16], index: 6, kind: output, shape index: {}]
  %s7 = sld [smem:[#allocation0]]
  $region38: #{tpu_custom_call.1} parent=0
    _
  %s9 = ssub.s32 1, %s7
  %s10 = scalar_select 0, %s9, %s7
  $region1: #{tpu_custom_call.1} parent=0
    #allocation2 [shape = 'u8[131072]{0}', space=vmem, size = 0x20000, scoped, tag = 'input window, operand 2, single buffered']
    #allocation3 [shape = 's32[1]{0}', space=sflag, size = 0x4, scoped, tag = 'scoped memory for tpu_custom_call.1']
    #allocation4 [shape = 's32[1]{0}', space=sflag, size = 0x4, scoped, tag = 'scoped memory for tpu_custom_call.1']
    #allocation5 [shape = 'u8[8192]{0}', space=vmem, size = 0x2000, scoped, tag = 'output window, operand 0, single buffered']
    %11 = vsyncpa [#allocation3], 0
    %12 = vsyncpa [#allocation4], 0
    // Predicated region
    $region2: #{tpu_custom_call.1} parent=1 // pred_check
      _
    $region3: #{tpu_custom_call.1} parent=1 // pred_check_branch
      %14 = sbr.rel (0) target = $region5
    $region4: #{tpu_custom_call.1} parent=1 // pred_region
      _
    $region5: #{tpu_custom_call.1} parent=1 // pred_fallthru
      _
    // Predicated region
    $region6: #{tpu_custom_call.1} parent=1 // pred_check
      _
    $region7: #{tpu_custom_call.1} parent=1 // pred_check_branch
      %16 = sbr.rel (0) target = $region9
    $region8: #{tpu_custom_call.1} parent=1 // pred_region
      _
    $region9: #{tpu_custom_call.1} parent=1 // pred_fallthru
      _
    // Predicated region
    $region10: #{tpu_custom_call.1} parent=1 // pred_check
      _
    $region11: #{tpu_custom_call.1} parent=1 // pred_check_branch
      %18 = sbr.rel (0) target = $region13
    $region12: #{tpu_custom_call.1} parent=1 // pred_region
      %20 = vsyncadd [#allocation3], 0
      %s21 = sshll.u32 %s2, 4
      %s22 = int_to_ptr.hbm [resolvable:$true] %s21
      %s23 = sshll.u32 [#allocation2], 4
      %s24 = int_to_ptr.vmem [resolvable:$true] %s23
      %29 = dma.hbm_to_vmem [thread:$0]  %s22, 4096, %s24, [#allocation3], 128, 128, 8
    $region13: #{tpu_custom_call.1} parent=1 // pred_fallthru
      _
    // Predicated region
    $region14: #{tpu_custom_call.1} parent=1 // pred_check
      _
    $region15: #{tpu_custom_call.1} parent=1 // pred_check_branch
      %31 = sbr.rel (0) target = $region17
    $region16: #{tpu_custom_call.1} parent=1 // pred_region
      _
    $region17: #{tpu_custom_call.1} parent=1 // pred_fallthru
      _
    // Predicated region
    $region18: #{tpu_custom_call.1} parent=1 // pred_check
      _
    $region19: #{tpu_custom_call.1} parent=1 // pred_check_branch
      %33 = sbr.rel (0) target = $region21
    $region20: #{tpu_custom_call.1} parent=1 // pred_region
      _
    $region21: #{tpu_custom_call.1} parent=1 // pred_fallthru
      _
    // Predicated region
    $region22: #{tpu_custom_call.1} parent=1 // pred_check
      _
    $region23: #{tpu_custom_call.1} parent=1 // pred_check_branch
      %35 = sbr.rel (0) target = $region25
    $region24: #{tpu_custom_call.1} parent=1 // pred_region
      _
    $region25: #{tpu_custom_call.1} parent=1 // pred_fallthru
      _
    // Predicated region
    $region26: #{tpu_custom_call.1} parent=1 // pred_check
      _
    $region27: #{tpu_custom_call.1} parent=1 // pred_check_branch
      %37 = sbr.rel (0) target = $region29
    $region28: #{tpu_custom_call.1} parent=1 // pred_region
      %39 = dma.done [#allocation3], 4096
    $region29: #{tpu_custom_call.1} parent=1 // pred_fallthru
      _
    %v40 = vld [vmem:[%s0] sm:$0xff]
    %v41 = vld [vmem:[%s0 + $0x8] sm:$0xff]
    %v42 = vld [vmem:[%s1] sm:$0xff]
    %v43 = vld [vmem:[%s4] sm:$0x1]
    %v45 = vperm.slane %v43, 0
    %vm47 = vcmask 64512
    %v49 = vsel %vm47, %v40, 0
    %v52 = vsel %vm47, %v41, 0
    %54 = vmatpush.msra.mxu0 0.0
    %55 = vmatpush.msra.mxu0 0.0
    %56 = vmatpush.msra.mxu0 0.0
    %57 = vmatpush.msra.mxu0 0.0
    %58 = vmatpush.msra.mxu0 0.0
    %59 = vmatpush.msra.mxu0 0.0
    %60 = vmatpush.msra.mxu0 0.0
    %61 = vmatpush.msra.mxu0 0.0
    %62 = vmatpush.msra.mxu0 0.0
    %63 = vmatpush.msra.mxu0 0.0
    %64 = vmatpush.msra.mxu0 0.0
    %65 = vmatpush.msra.mxu0 0.0
    %66 = vmatpush.msra.mxu0 0.0
    %67 = vmatpush.msra.mxu0 0.0
    %68 = vmatpush.msra.mxu0 0.0
    %69 = vmatpush.msra.mxu0 %v42
    %70 = vmatmul.f32.gmra.mxu0 %v49
    %v71 = vpop.f32.mrf.mxu0
    %v72 = vadd.f32 %v45, %v71
    %73 = vmatmul.f32.gmra.mxu0 %v52
    %v74 = vpop.f32.mrf.mxu0
    %v75 = vadd.f32 %v45, %v74
    %76 = vdwg.mxu0
    %v77 = vtanh.pop %v72
    %v78 = vtanh.pop %v75
    %v79 = vld [vmem:[#allocation2] sm:$0xff]
    %v80 = vld [vmem:[#allocation2 + $0x8] sm:$0xff]
    %v81 = vld [vmem:[#allocation2 + $0x10] sm:$0xff]
    %v82 = vld [vmem:[#allocation2 + $0x18] sm:$0xff]
    %v83 = vld [vmem:[#allocation2 + $0x20] sm:$0xff]
    %v84 = vld [vmem:[#allocation2 + $0x28] sm:$0xff]
    %v85 = vld [vmem:[#allocation2 + $0x30] sm:$0xff]
    %v86 = vld [vmem:[#allocation2 + $0x38] sm:$0xff]
    %v87 = vld [vmem:[#allocation2 + $0x40] sm:$0xff]
    %v88 = vld [vmem:[#allocation2 + $0x48] sm:$0xff]
    %v89 = vld [vmem:[#allocation2 + $0x50] sm:$0xff]
    %v90 = vld [vmem:[#allocation2 + $0x58] sm:$0xff]
    %v91 = vld [vmem:[#allocation2 + $0x60] sm:$0xff]
    %v92 = vld [vmem:[#allocation2 + $0x68] sm:$0xff]
    %v93 = vld [vmem:[#allocation2 + $0x70] sm:$0xff]
    %v94 = vld [vmem:[#allocation2 + $0x78] sm:$0xff]
    %s95 = scalar_lea.vmem %s4, 1
    %v96 = vld [vmem:[%s95] sm:$0x1]
    %v98 = vperm.slane %v96, 0
    %100 = vmatpush.msra.mxu0 %v94
    %101 = vmatpush.msra.mxu0 %v93
    %102 = vmatpush.msra.mxu0 %v92
    %103 = vmatpush.msra.mxu0 %v91
    %104 = vmatpush.msra.mxu0 %v90
    %105 = vmatpush.msra.mxu0 %v89
    %106 = vmatpush.msra.mxu0 %v88
    %107 = vmatpush.msra.mxu0 %v87
    %108 = vmatpush.msra.mxu0 %v86
    %109 = vmatpush.msra.mxu0 %v85
    %110 = vmatpush.msra.mxu0 %v84
    %111 = vmatpush.msra.mxu0 %v83
    %112 = vmatpush.msra.mxu0 %v82
    %113 = vmatpush.msra.mxu0 %v81
    %114 = vmatpush.msra.mxu0 %v80
    %115 = vmatpush.msra.mxu0 %v79
    %116 = vmatmul.f32.gmra.mxu0 %v77
    %v117 = vpop.f32.mrf.mxu0
    %v118 = vadd.f32 %v98, %v117
    %119 = vmatmul.f32.gmra.mxu0 %v78
    %v120 = vpop.f32.mrf.mxu0
    %v121 = vadd.f32 %v98, %v120
    %122 = vdwg.mxu0
    %v123 = vtanh.pop %v118
    %v124 = vtanh.pop %v121
    %s125 = scalar_lea.vmem [#allocation2], 128
    %v126 = vld [vmem:[%s125] sm:$0xff]
    %v127 = vld [vmem:[%s125 + $0x8] sm:$0xff]
    %v128 = vld [vmem:[%s125 + $0x10] sm:$0xff]
    %v129 = vld [vmem:[%s125 + $0x18] sm:$0xff]
    %v130 = vld [vmem:[%s125 + $0x20] sm:$0xff]
    %v131 = vld [vmem:[%s125 + $0x28] sm:$0xff]
    %v132 = vld [vmem:[%s125 + $0x30] sm:$0xff]
    %v133 = vld [vmem:[%s125 + $0x38] sm:$0xff]
    %v134 = vld [vmem:[%s125 + $0x40] sm:$0xff]
    %v135 = vld [vmem:[%s125 + $0x48] sm:$0xff]
    %v136 = vld [vmem:[%s125 + $0x50] sm:$0xff]
    %v137 = vld [vmem:[%s125 + $0x58] sm:$0xff]
    %v138 = vld [vmem:[%s125 + $0x60] sm:$0xff]
    %v139 = vld [vmem:[%s125 + $0x68] sm:$0xff]
    %v140 = vld [vmem:[%s125 + $0x70] sm:$0xff]
    %v141 = vld [vmem:[%s125 + $0x78] sm:$0xff]
    %s142 = scalar_lea.vmem %s4, 2
    %v143 = vld [vmem:[%s142] sm:$0x1]
    %v145 = vperm.slane %v143, 0
    %147 = vmatpush.msra.mxu0 %v141
    %148 = vmatpush.msra.mxu0 %v140
    %149 = vmatpush.msra.mxu0 %v139
    %150 = vmatpush.msra.mxu0 %v138
    %151 = vmatpush.msra.mxu0 %v137
    %152 = vmatpush.msra.mxu0 %v136
    %153 = vmatpush.msra.mxu0 %v135
    %154 = vmatpush.msra.mxu0 %v134
    %155 = vmatpush.msra.mxu0 %v133
    %156 = vmatpush.msra.mxu0 %v132
    %157 = vmatpush.msra.mxu0 %v131
    %158 = vmatpush.msra.mxu0 %v130
    %159 = vmatpush.msra.mxu0 %v129
    %160 = vmatpush.msra.mxu0 %v128
    %161 = vmatpush.msra.mxu0 %v127
    %162 = vmatpush.msra.mxu0 %v126
    %163 = vmatmul.f32.gmra.mxu0 %v123
    %v164 = vpop.f32.mrf.mxu0
    %v165 = vadd.f32 %v145, %v164
    %166 = vmatmul.f32.gmra.mxu0 %v124
    %v167 = vpop.f32.mrf.mxu0
    %v168 = vadd.f32 %v145, %v167
    %169 = vdwg.mxu0
    %v170 = vtanh.pop %v165
    %v171 = vtanh.pop %v168
    %v172 = vld [vmem:[%s3] sm:$0xff]
    %v173 = vld [vmem:[%s3 + $0x8] sm:$0xff]
    %v174 = vld [vmem:[%s3 + $0x10] sm:$0xff]
    %v175 = vld [vmem:[%s3 + $0x18] sm:$0xff]
    %v176 = vld [vmem:[%s3 + $0x20] sm:$0xff]
    %v177 = vld [vmem:[%s3 + $0x28] sm:$0xff]
    %v178 = vld [vmem:[%s3 + $0x30] sm:$0xff]
    %v179 = vld [vmem:[%s3 + $0x38] sm:$0xff]
    %v180 = vld [vmem:[%s3 + $0x40] sm:$0xff]
    %v181 = vld [vmem:[%s3 + $0x48] sm:$0xff]
    %v182 = vld [vmem:[%s3 + $0x50] sm:$0xff]
    %v183 = vld [vmem:[%s3 + $0x58] sm:$0xff]
    %v184 = vld [vmem:[%s3 + $0x60] sm:$0xff]
    %v185 = vld [vmem:[%s3 + $0x68] sm:$0xff]
    %v186 = vld [vmem:[%s3 + $0x70] sm:$0xff]
    %v187 = vld [vmem:[%s3 + $0x78] sm:$0xff]
    %v188 = vld [vmem:[%s5] sm:$0x1]
    %v190 = vperm.slane %v188, 0
    %192 = vmatpush.msra.mxu0 %v187
    %193 = vmatpush.msra.mxu0 %v186
    %194 = vmatpush.msra.mxu0 %v185
    %195 = vmatpush.msra.mxu0 %v184
    %196 = vmatpush.msra.mxu0 %v183
    %197 = vmatpush.msra.mxu0 %v182
    %198 = vmatpush.msra.mxu0 %v181
    %199 = vmatpush.msra.mxu0 %v180
    %200 = vmatpush.msra.mxu0 %v179
    %201 = vmatpush.msra.mxu0 %v178
    %202 = vmatpush.msra.mxu0 %v177
    %203 = vmatpush.msra.mxu0 %v176
    %204 = vmatpush.msra.mxu0 %v175
    %205 = vmatpush.msra.mxu0 %v174
    %206 = vmatpush.msra.mxu0 %v173
    %207 = vmatpush.msra.mxu0 %v172
    %208 = vmatmul.f32.gmra.mxu0 %v170
    %v209 = vpop.f32.mrf.mxu0
    %v210 = vadd.f32 %v190, %v209
    %211 = vmatmul.f32.gmra.mxu0 %v171
    %v212 = vpop.f32.mrf.mxu0
    %v213 = vadd.f32 %v190, %v212
    %214 = vdwg.mxu0
    %vm215 = vcmask 130048
    %216 = vst.msk [vmem:[#allocation5] sm:$0xff] %vm215, %v210
    %217 = vst.msk [vmem:[#allocation5 + $0x8] sm:$0xff] %vm215, %v213
    // Predicated region
    $region30: #{tpu_custom_call.1} parent=1 // pred_check
      _
    $region31: #{tpu_custom_call.1} parent=1 // pred_check_branch
      %219 = sbr.rel (0) target = $region33
    $region32: #{tpu_custom_call.1} parent=1 // pred_region
      %221 = vsyncadd [#allocation4], 0
      %s222 = sshll.u32 [#allocation5], 4
      %s223 = int_to_ptr.vmem [resolvable:$true] %s222
      %s224 = sshll.u32 %s6, 4
      %s225 = int_to_ptr.hbm [resolvable:$true] %s224
      %230 = dma.vmem_to_hbm [thread:$0]  %s223, 256, %s225, [#allocation4], 128, 128, 8
    $region33: #{tpu_custom_call.1} parent=1 // pred_fallthru
      _
    // Predicated region
    $region34: #{tpu_custom_call.1} parent=1 // pred_check
      _
    $region35: #{tpu_custom_call.1} parent=1 // pred_check_branch
      %232 = sbr.rel (0) target = $region37
    $region36: #{tpu_custom_call.1} parent=1 // pred_region
      %234 = dma.done [#allocation4], 256
    $region37: #{tpu_custom_call.1} parent=1 // pred_fallthru
      _
    %235 = vsyncpa [#allocation3], 1
    %236 = vsyncpa [#allocation4], 1

</llo_original>
